<compile_context>
chip_gen: v5e
topology: v5e:2x2
jax: 0.10.0
libtpu: 0.0.40
codegen_flags: <defaults>
</compile_context>

<pallas_src>
import functools

import jax
import jax.numpy as jnp
from jax.experimental import pallas as pl
from jax.experimental.pallas import tpu as pltpu

INPUT_DIM = 60
LATENT_DIM = 5
HIDDEN_DIM = 32

_LANES = 128                                    # lane width of param / output slabs
_IN_COLS = INPUT_DIM + LATENT_DIM               # x | eps packed input (65)
_OUT_WIDTH = INPUT_DIM + 2 * LATENT_DIM         # recon | mu | logvar (70 useful lanes)


def _round_up(x, m):
    return ((x + m - 1) // m) * m


def _build_layout(input_dim, latent_dim, hidden_dim):
    """Row layout of the packed (rows, 128) f32 parameter slab.

    Each section starts on an 8-row boundary so static slices stay
    sublane-tile aligned. Returns ({name: (row0, nrows, ncols)}, total_rows).
    """
    sections = [
        ("w1", input_dim, hidden_dim), ("b1", 1, hidden_dim),
        ("w2", hidden_dim, hidden_dim), ("b2", 1, hidden_dim),
        ("wh", hidden_dim, 2 * latent_dim), ("bh", 1, 2 * latent_dim),  # fused mu|logvar head
        ("wd1", latent_dim, hidden_dim), ("bd1", 1, hidden_dim),
        ("wd2", hidden_dim, hidden_dim), ("bd2", 1, hidden_dim),
        ("wd3", hidden_dim, input_dim), ("bd3", 1, input_dim),
    ]
    layout = {}
    row = 0
    for name, nr, nc in sections:
        layout[name] = (row, nr, nc)
        row += _round_up(nr, 8)
    return layout, _round_up(row, 8)


_LAYOUT, _SLAB_ROWS = _build_layout(INPUT_DIM, LATENT_DIM, HIDDEN_DIM)


# ---------------------------------------------------------------------------
# kernel
# ---------------------------------------------------------------------------
def _vae_kernel(xe_ref, p_ref, out_ref):
    """One batch tile: encoder -> heads -> reparameterize -> decoder, fused."""

    def wmat(name):                                  # bf16 weight slice for the MXU
        r0, nr, nc = _LAYOUT[name]
        return p_ref[r0:r0 + nr, 0:nc].astype(jnp.bfloat16)

    def bias(name):                                  # f32 bias row
        r0, nr, nc = _LAYOUT[name]
        return p_ref[r0:r0 + nr, 0:nc]

    def dense(a, wname, bname):                      # bf16 x bf16 -> f32 acc, f32 bias
        return jnp.dot(a.astype(jnp.bfloat16), wmat(wname),
                       preferred_element_type=jnp.float32) + bias(bname)

    xe = xe_ref[...]
    x = xe[:, 0:INPUT_DIM]
    eps = xe[:, INPUT_DIM:INPUT_DIM + LATENT_DIM]

    # ---- encoder: Linear + ReLU, Linear + ReLU ----
    h = jnp.maximum(dense(x, "w1", "b1"), 0.0)
    h = jnp.maximum(dense(h, "w2", "b2"), 0.0)

    # ---- fused mu|logvar head: one (32, 10) matmul ----
    head = dense(h, "wh", "bh")                      # (tb, 2*latent)  f32
    mu = head[:, 0:LATENT_DIM]
    logvar = head[:, LATENT_DIM:2 * LATENT_DIM]

    # ---- reparameterize: z = mu + eps * exp(0.5 * logvar)  (f32 VPU/EUP) ----
    z = mu + eps * jnp.exp(0.5 * logvar)

    # ---- decoder: Linear+ReLU, Linear+ReLU, Linear ----
    d = jnp.maximum(dense(z, "wd1", "bd1"), 0.0)
    d = jnp.maximum(dense(d, "wd2", "bd2"), 0.0)
    recon = dense(d, "wd3", "bd3")

    # ---- packed output: recon | mu|logvar head; lanes 70..127 left undefined
    out_ref[:, 0:INPUT_DIM] = recon
    out_ref[:, INPUT_DIM:INPUT_DIM + 2 * LATENT_DIM] = head


# ---------------------------------------------------------------------------
# parameter init / packing
# ---------------------------------------------------------------------------
def init_params(key, input_dim=INPUT_DIM, latent_dim=LATENT_DIM, hidden_dim=HIDDEN_DIM):
    """nn.Linear-style init. Weights stored (in, out); biases (1, out)."""
    def linear(k, fan_in, fan_out):
        kw, kb = jax.random.split(k)
        bound = 1.0 / jnp.sqrt(fan_in)
        w = jax.random.uniform(kw, (fan_in, fan_out), jnp.float32, -bound, bound)
        b = jax.random.uniform(kb, (1, fan_out), jnp.float32, -bound, bound)
        return w, b

    keys = jax.random.split(key, 7)
    w1, b1 = linear(keys[0], input_dim, hidden_dim)
    w2, b2 = linear(keys[1], hidden_dim, hidden_dim)
    wmu, bmu = linear(keys[2], hidden_dim, latent_dim)
    wlv, blv = linear(keys[3], hidden_dim, latent_dim)
    wd1, bd1 = linear(keys[4], latent_dim, hidden_dim)
    wd2, bd2 = linear(keys[5], hidden_dim, hidden_dim)
    wd3, bd3 = linear(keys[6], hidden_dim, input_dim)
    return dict(
        w1=w1, b1=b1, w2=w2, b2=b2,
        wmu=wmu, bmu=bmu, wlv=wlv, blv=blv,
        wd1=wd1, bd1=bd1, wd2=wd2, bd2=bd2, wd3=wd3, bd3=bd3,
    )


def pack_params(params):
    """Pack all weights/biases into one (rows, 128) f32 slab (call once, outside jit)."""
    tensors = {
        "w1": params["w1"], "b1": params["b1"],
        "w2": params["w2"], "b2": params["b2"],
        "wh": jnp.concatenate([params["wmu"], params["wlv"]], axis=1),
        "bh": jnp.concatenate([params["bmu"], params["blv"]], axis=1),
        "wd1": params["wd1"], "bd1": params["bd1"],
        "wd2": params["wd2"], "bd2": params["bd2"],
        "wd3": params["wd3"], "bd3": params["bd3"],
    }
    slab = jnp.zeros((_SLAB_ROWS, _LANES), jnp.float32)
    for name, (r0, nr, nc) in _LAYOUT.items():
        t = tensors[name].reshape(nr, nc).astype(jnp.float32)
        slab = slab.at[r0:r0 + nr, 0:nc].set(t)
    return slab


# ---------------------------------------------------------------------------
# wrapper
# ---------------------------------------------------------------------------
@functools.partial(jax.jit, static_argnames=("max_tb",))
def vae_forward(x, eps, slab, max_tb=2048):
    """Fused VAE forward. Returns (reconstructed, mu, logvar)."""
    batch, input_dim = x.shape
    latent_dim = LATENT_DIM

    # Batch tile. Split the batch into >=2 tiles whenever it spans more than
    # one minimum (8-row) tile so the "parallel" grid axis can shard across
    # the 2 TensorCores on v7x; then cap by max_tb and round to a multiple of 8.
    half = _round_up(pl.cdiv(batch, 2), 8)
    tb = max(8, min(max_tb, half))
    padded = _round_up(batch, tb)

    # Pack x | eps into one lane-contiguous input slab -> a single DMA per step.
    xe = jnp.concatenate([x, eps], axis=1)           # (batch, 65)
    if padded != batch:
        xe = jnp.pad(xe, ((0, padded - batch), (0, 0)))
    grid = (padded // tb,)

    flops_per_row = 2 * (
        input_dim * HIDDEN_DIM + HIDDEN_DIM * HIDDEN_DIM + HIDDEN_DIM * 2 * latent_dim
        + latent_dim * HIDDEN_DIM + HIDDEN_DIM * HIDDEN_DIM + HIDDEN_DIM * input_dim
    )
    cost = pl.CostEstimate(
        flops=padded * flops_per_row,
        transcendentals=padded * latent_dim,
        bytes_accessed=padded * (_IN_COLS + _LANES) * 4 + _SLAB_ROWS * _LANES * 4,
    )

    out = pl.pallas_call(
        _vae_kernel,
        out_shape=jax.ShapeDtypeStruct((padded, _LANES), jnp.float32),
        grid_spec=pltpu.PrefetchScalarGridSpec(
            num_scalar_prefetch=0,
            grid=grid,
            in_specs=[
                pl.BlockSpec((tb, _IN_COLS), lambda i: (i, 0)),        # x|eps: batch-tiled
                pl.BlockSpec((_SLAB_ROWS, _LANES), lambda i: (0, 0)),  # params: resident
            ],
            out_specs=pl.BlockSpec((tb, _LANES), lambda i: (i, 0)),    # lane-dense slab
        ),
        compiler_params=pltpu.CompilerParams(
            dimension_semantics=("parallel",),
            vmem_limit_bytes=32 * 1024 * 1024,   # covers v5e's 16 MiB scoped default
        ),
        cost_estimate=cost,
    )(xe, slab)

    recon = out[:batch, :input_dim]
    mu = out[:batch, input_dim:input_dim + latent_dim]
    logvar = out[:batch, input_dim + latent_dim:input_dim + 2 * latent_dim]
    return recon, mu, logvar


def vae_loss(reconstructed, x, mu, logvar, beta=1.0):
    """Matches VAE.loss_function (tiny reductions; plain JAX)."""
    mse = jnp.mean((reconstructed - x) ** 2)
    kl_div = -0.5 * jnp.mean(1.0 + logvar - mu**2 - jnp.exp(logvar))
    return mse + beta * kl_div, mse, kl_div


def _reference_forward(x, eps, p):
    """Pure-JAX f32 reference for sanity checking."""
    h = jnp.maximum(x @ p["w1"] + p["b1"], 0.0)
    h = jnp.maximum(h @ p["w2"] + p["b2"], 0.0)
    mu = h @ p["wmu"] + p["bmu"]
    logvar = h @ p["wlv"] + p["blv"]
    z = mu + eps * jnp.exp(0.5 * logvar)
    d = jnp.maximum(z @ p["wd1"] + p["bd1"], 0.0)
    d = jnp.maximum(d @ p["wd2"] + p["bd2"], 0.0)
    recon = d @ p["wd3"] + p["bd3"]
    return recon, mu, logvar


if __name__ == "__main__":
    key = jax.random.PRNGKey(0)
    k_params, k_x, k_eps, k_x2, k_eps2 = jax.random.split(key, 5)

    params = init_params(k_params)
    slab = pack_params(params)

    # --- small primary test (batch=8, single grid step) ---
    batch = 8
    x = jax.random.normal(k_x, (batch, INPUT_DIM), jnp.float32)
    eps = jax.random.normal(k_eps, (batch, LATENT_DIM), jnp.float32)  # torch.randn_like sample

    recon, mu, logvar = vae_forward(x, eps, slab)
    jax.block_until_ready((recon, mu, logvar))

    # bf16 MXU operands (f32 accumulation) -> tolerances loosened vs pure f32.
    r_ref, m_ref, lv_ref = _reference_forward(x, eps, params)
    assert jnp.allclose(recon, r_ref, atol=1e-1, rtol=1e-1)
    assert jnp.allclose(mu, m_ref, atol=5e-2, rtol=5e-2)
    assert jnp.allclose(logvar, lv_ref, atol=5e-2, rtol=5e-2)

    total, mse, kl = vae_loss(recon, x, mu, logvar)
    jax.block_until_ready((total, mse, kl))

    # --- secondary test: ragged batch + multi-step grid (tb=16 -> 3 steps) ---
    batch2 = 40
    x2 = jax.random.normal(k_x2, (batch2, INPUT_DIM), jnp.float32)
    eps2 = jax.random.normal(k_eps2, (batch2, LATENT_DIM), jnp.float32)
    r2, m2, lv2 = vae_forward(x2, eps2, slab, max_tb=16)
    jax.block_until_ready((r2, m2, lv2))
    r2_ref, m2_ref, lv2_ref = _reference_forward(x2, eps2, params)
    assert jnp.allclose(r2, r2_ref, atol=1e-1, rtol=1e-1)
    assert jnp.allclose(m2, m2_ref, atol=5e-2, rtol=5e-2)
    assert jnp.allclose(lv2, lv2_ref, atol=5e-2, rtol=5e-2)

    print("KERNEL_OK")
</pallas_src>

<mosaic_0001>
module attributes {stable_mosaic.version = 11 : i64} {
  func.func @_vae_kernel(%arg0: i32, %arg1: memref<8x65xf32, #tpu.memory_space<vmem>>, %arg2: memref<248x128xf32, #tpu.memory_space<vmem>>, %arg3: memref<8x128xf32, #tpu.memory_space<vmem>>) attributes {dimension_semantics = [#tpu.dimension_semantics<parallel>], iteration_bounds = array<i64: 1>, scalar_prefetch = 0 : i64, scratch_operands = 0 : i64, tpu.core_type = #tpu.core_type<tc>, window_params = [{transform_indices = @transform_0, window_bounds = array<i64: 8, 65>}, {pipeline_mode = #tpu.pipeline_mode<synchronous>, transform_indices = @transform_1, window_bounds = array<i64: 248, 128>}, {transform_indices = @transform_2, window_bounds = array<i64: 8, 128>}]} {
    %c0 = arith.constant 0 : index
    %c0_0 = arith.constant 0 : index
    %0 = vector.load %arg1[%c0, %c0_0] : memref<8x65xf32, #tpu.memory_space<vmem>>, vector<8x65xf32>
    %1 = vector.extract_strided_slice %0 {offsets = [0, 0], sizes = [8, 60], strides = [1, 1]} : vector<8x65xf32> to vector<8x60xf32>
    %2 = vector.extract_strided_slice %0 {offsets = [0, 60], sizes = [8, 5], strides = [1, 1]} : vector<8x65xf32> to vector<8x5xf32>
    %3 = arith.truncf %1 : vector<8x60xf32> to vector<8x60xbf16>
    %c0_1 = arith.constant 0 : index
    %c0_2 = arith.constant 0 : index
    %4 = vector.load %arg2[%c0_1, %c0_2] : memref<248x128xf32, #tpu.memory_space<vmem>>, vector<60x32xf32>
    %5 = arith.truncf %4 : vector<60x32xf32> to vector<60x32xbf16>
    %cst = arith.constant dense<0.000000e+00> : vector<8x32xf32>
    %6 = tpu.matmul %3, %5, %cst {dimension_numbers = #tpu.dot_dimension_numbers<[1], [0], [0], [1], [0, 0, 1, 1], [], []>} : vector<8x60xbf16>, vector<60x32xbf16>, vector<8x32xf32> -> vector<8x32xf32>
    %c64 = arith.constant 64 : index
    %c0_3 = arith.constant 0 : index
    %7 = vector.load %arg2[%c64, %c0_3] : memref<248x128xf32, #tpu.memory_space<vmem>>, vector<1x32xf32>
    %8 = vector.broadcast %7 : vector<1x32xf32> to vector<8x32xf32>
    %9 = arith.addf %6, %8 : vector<8x32xf32>
    %cst_4 = arith.constant 0.000000e+00 : f32
    %10 = vector.broadcast %cst_4 : f32 to vector<8x32xf32>
    %11 = arith.maximumf %9, %10 : vector<8x32xf32>
    %12 = arith.truncf %11 : vector<8x32xf32> to vector<8x32xbf16>
    %c72 = arith.constant 72 : index
    %c0_5 = arith.constant 0 : index
    %13 = vector.load %arg2[%c72, %c0_5] : memref<248x128xf32, #tpu.memory_space<vmem>>, vector<32x32xf32>
    %14 = arith.truncf %13 : vector<32x32xf32> to vector<32x32xbf16>
    %cst_6 = arith.constant dense<0.000000e+00> : vector<8x32xf32>
    %15 = tpu.matmul %12, %14, %cst_6 {dimension_numbers = #tpu.dot_dimension_numbers<[1], [0], [0], [1], [0, 0, 1, 1], [], []>} : vector<8x32xbf16>, vector<32x32xbf16>, vector<8x32xf32> -> vector<8x32xf32>
    %c104 = arith.constant 104 : index
    %c0_7 = arith.constant 0 : index
    %16 = vector.load %arg2[%c104, %c0_7] : memref<248x128xf32, #tpu.memory_space<vmem>>, vector<1x32xf32>
    %17 = vector.broadcast %16 : vector<1x32xf32> to vector<8x32xf32>
    %18 = arith.addf %15, %17 : vector<8x32xf32>
    %cst_8 = arith.constant 0.000000e+00 : f32
    %19 = vector.broadcast %cst_8 : f32 to vector<8x32xf32>
    %20 = arith.maximumf %18, %19 : vector<8x32xf32>
    %21 = arith.truncf %20 : vector<8x32xf32> to vector<8x32xbf16>
    %c112 = arith.constant 112 : index
    %c0_9 = arith.constant 0 : index
    %22 = vector.load %arg2[%c112, %c0_9] : memref<248x128xf32, #tpu.memory_space<vmem>>, vector<32x10xf32>
    %23 = arith.truncf %22 : vector<32x10xf32> to vector<32x10xbf16>
    %cst_10 = arith.constant dense<0.000000e+00> : vector<8x10xf32>
    %24 = tpu.matmul %21, %23, %cst_10 {dimension_numbers = #tpu.dot_dimension_numbers<[1], [0], [0], [1], [0, 0, 1, 1], [], []>} : vector<8x32xbf16>, vector<32x10xbf16>, vector<8x10xf32> -> vector<8x10xf32>
    %c144 = arith.constant 144 : index
    %c0_11 = arith.constant 0 : index
    %25 = vector.load %arg2[%c144, %c0_11] : memref<248x128xf32, #tpu.memory_space<vmem>>, vector<1x10xf32>
    %26 = vector.broadcast %25 : vector<1x10xf32> to vector<8x10xf32>
    %27 = arith.addf %24, %26 : vector<8x10xf32>
    %28 = vector.extract_strided_slice %27 {offsets = [0, 0], sizes = [8, 5], strides = [1, 1]} : vector<8x10xf32> to vector<8x5xf32>
    %29 = vector.extract_strided_slice %27 {offsets = [0, 5], sizes = [8, 5], strides = [1, 1]} : vector<8x10xf32> to vector<8x5xf32>
    %cst_12 = arith.constant 5.000000e-01 : f32
    %30 = vector.broadcast %cst_12 : f32 to vector<8x5xf32>
    %31 = arith.mulf %30, %29 : vector<8x5xf32>
    %32 = math.exp %31 : vector<8x5xf32>
    %33 = arith.mulf %2, %32 : vector<8x5xf32>
    %34 = arith.addf %28, %33 : vector<8x5xf32>
    %35 = arith.truncf %34 : vector<8x5xf32> to vector<8x5xbf16>
    %c152 = arith.constant 152 : index
    %c0_13 = arith.constant 0 : index
    %36 = vector.load %arg2[%c152, %c0_13] : memref<248x128xf32, #tpu.memory_space<vmem>>, vector<5x32xf32>
    %37 = arith.truncf %36 : vector<5x32xf32> to vector<5x32xbf16>
    %cst_14 = arith.constant dense<0.000000e+00> : vector<8x32xf32>
    %38 = tpu.matmul %35, %37, %cst_14 {dimension_numbers = #tpu.dot_dimension_numbers<[1], [0], [0], [1], [0, 0, 1, 1], [], []>} : vector<8x5xbf16>, vector<5x32xbf16>, vector<8x32xf32> -> vector<8x32xf32>
    %c160 = arith.constant 160 : index
    %c0_15 = arith.constant 0 : index
    %39 = vector.load %arg2[%c160, %c0_15] : memref<248x128xf32, #tpu.memory_space<vmem>>, vector<1x32xf32>
    %40 = vector.broadcast %39 : vector<1x32xf32> to vector<8x32xf32>
    %41 = arith.addf %38, %40 : vector<8x32xf32>
    %cst_16 = arith.constant 0.000000e+00 : f32
    %42 = vector.broadcast %cst_16 : f32 to vector<8x32xf32>
    %43 = arith.maximumf %41, %42 : vector<8x32xf32>
    %44 = arith.truncf %43 : vector<8x32xf32> to vector<8x32xbf16>
    %c168 = arith.constant 168 : index
    %c0_17 = arith.constant 0 : index
    %45 = vector.load %arg2[%c168, %c0_17] : memref<248x128xf32, #tpu.memory_space<vmem>>, vector<32x32xf32>
    %46 = arith.truncf %45 : vector<32x32xf32> to vector<32x32xbf16>
    %cst_18 = arith.constant dense<0.000000e+00> : vector<8x32xf32>
    %47 = tpu.matmul %44, %46, %cst_18 {dimension_numbers = #tpu.dot_dimension_numbers<[1], [0], [0], [1], [0, 0, 1, 1], [], []>} : vector<8x32xbf16>, vector<32x32xbf16>, vector<8x32xf32> -> vector<8x32xf32>
    %c200 = arith.constant 200 : index
    %c0_19 = arith.constant 0 : index
    %48 = vector.load %arg2[%c200, %c0_19] : memref<248x128xf32, #tpu.memory_space<vmem>>, vector<1x32xf32>
    %49 = vector.broadcast %48 : vector<1x32xf32> to vector<8x32xf32>
    %50 = arith.addf %47, %49 : vector<8x32xf32>
    %cst_20 = arith.constant 0.000000e+00 : f32
    %51 = vector.broadcast %cst_20 : f32 to vector<8x32xf32>
    %52 = arith.maximumf %50, %51 : vector<8x32xf32>
    %53 = arith.truncf %52 : vector<8x32xf32> to vector<8x32xbf16>
    %c208 = arith.constant 208 : index
    %c0_21 = arith.constant 0 : index
    %54 = vector.load %arg2[%c208, %c0_21] : memref<248x128xf32, #tpu.memory_space<vmem>>, vector<32x60xf32>
    %55 = arith.truncf %54 : vector<32x60xf32> to vector<32x60xbf16>
    %cst_22 = arith.constant dense<0.000000e+00> : vector<8x60xf32>
    %56 = tpu.matmul %53, %55, %cst_22 {dimension_numbers = #tpu.dot_dimension_numbers<[1], [0], [0], [1], [0, 0, 1, 1], [], []>} : vector<8x32xbf16>, vector<32x60xbf16>, vector<8x60xf32> -> vector<8x60xf32>
    %c240 = arith.constant 240 : index
    %c0_23 = arith.constant 0 : index
    %57 = vector.load %arg2[%c240, %c0_23] : memref<248x128xf32, #tpu.memory_space<vmem>>, vector<1x60xf32>
    %58 = vector.broadcast %57 : vector<1x60xf32> to vector<8x60xf32>
    %59 = arith.addf %56, %58 : vector<8x60xf32>
    %c0_24 = arith.constant 0 : index
    %c0_25 = arith.constant 0 : index
    %60 = vector.load %arg3[%c0_24, %c0_25] : memref<8x128xf32, #tpu.memory_space<vmem>>, vector<8x60xf32>
    tpu.vector_store %arg3[%c0_24, %c0_25], %59 {strides = array<i32>} : memref<8x128xf32, #tpu.memory_space<vmem>>, vector<8x60xf32>,
    %c0_26 = arith.constant 0 : index
    %c60 = arith.constant 60 : index
    %61 = vector.load %arg3[%c0_26, %c60] : memref<8x128xf32, #tpu.memory_space<vmem>>, vector<8x10xf32>
    tpu.vector_store %arg3[%c0_26, %c60], %27 {strides = array<i32>} : memref<8x128xf32, #tpu.memory_space<vmem>>, vector<8x10xf32>,
    return
  }
  func.func @transform_0(%arg0: i32) -> (i32, i32) {
    %c0_i32 = arith.constant 0 : i32
    %c0_i32_0 = arith.constant 0 : i32
    return %arg0, %c0_i32 : i32, i32
  }
  func.func @transform_1(%arg0: i32) -> (i32, i32) {
    %c0_i32 = arith.constant 0 : i32
    %c0_i32_0 = arith.constant 0 : i32
    %c0_i32_1 = arith.constant 0 : i32
    return %c0_i32, %c0_i32_0 : i32, i32
  }
  func.func @transform_2(%arg0: i32) -> (i32, i32) {
    %c0_i32 = arith.constant 0 : i32
    %c0_i32_0 = arith.constant 0 : i32
    return %arg0, %c0_i32 : i32, i32
  }
}

</mosaic_0001>

<llo_original>
// kernel: vae_forward.1
$region0: #{vae_forward.1}
  #allocation0 [shape = 'u32[]', space=smem, size = 0x4, offset = 0x4, fixed_abs, tag = 'smem constant byte address 0x4 - core index']
  #allocation1 [shape = 'u32[72,128]{1,0:T(1,128)}', space=vmem, size = 0x9000, scoped, tag = 'internal scratch']
  %s0 = inlined_call_operand.vmem [shape: f32[8,65], index: 0, kind: input, shape index: {}]
  %s1 = inlined_call_operand.hbm [shape: f32[248,128], index: 1, kind: input, shape index: {}]
  %s2 = inlined_call_operand.vmem [shape: f32[8,128], index: 2, kind: output, shape index: {}]
  %s3 = sld [smem:[#allocation0]]
  $region22: #{vae_forward.1} parent=0
    _
  %s5 = ssub.s32 1, %s3
  %s6 = scalar_select 0, %s5, %s3
  $region1: #{vae_forward.1} parent=0
    #allocation2 [shape = 'u8[126976]{0}', space=vmem, size = 0x1f000, scoped, tag = 'input window, operand 1, single buffered']
    #allocation3 [shape = 's32[1]{0}', space=sflag, size = 0x4, scoped, tag = 'scoped memory for vae_forward.1']
    %7 = vsyncpa [#allocation3], 0
    // Predicated region
    $region2: #{vae_forward.1} parent=1 // pred_check
      _
    $region3: #{vae_forward.1} parent=1 // pred_check_branch
      %9 = sbr.rel (0) target = $region5
    $region4: #{vae_forward.1} parent=1 // pred_region
      _
    $region5: #{vae_forward.1} parent=1 // pred_fallthru
      _
    // Predicated region
    $region6: #{vae_forward.1} parent=1 // pred_check
      _
    $region7: #{vae_forward.1} parent=1 // pred_check_branch
      %11 = sbr.rel (0) target = $region9
    $region8: #{vae_forward.1} parent=1 // pred_region
      %13 = vsyncadd [#allocation3], 0
      %s14 = sshll.u32 %s1, 4
      %s15 = int_to_ptr.hbm [resolvable:$true] %s14
      %s16 = sshll.u32 [#allocation2], 4
      %s17 = int_to_ptr.vmem [resolvable:$true] %s16
      %22 = dma.hbm_to_vmem [thread:$0]  %s15, 3968, %s17, [#allocation3], 128, 128, 8
    $region9: #{vae_forward.1} parent=1 // pred_fallthru
      _
    // Predicated region
    $region10: #{vae_forward.1} parent=1 // pred_check
      _
    $region11: #{vae_forward.1} parent=1 // pred_check_branch
      %24 = sbr.rel (0) target = $region13
    $region12: #{vae_forward.1} parent=1 // pred_region
      %26 = dma.done [#allocation3], 3968
    $region13: #{vae_forward.1} parent=1 // pred_fallthru
      _
    %v28 = vld [vmem:[%s0] sm:$0xff]
    %v29 = vpack.c.bf16 %v28, %v28
    %v30 = vld [vmem:[#allocation2] sm:$0xff]
    %v31 = vld [vmem:[#allocation2 + $0x8] sm:$0xff]
    %v32 = vld [vmem:[#allocation2 + $0x10] sm:$0xff]
    %v33 = vld [vmem:[#allocation2 + $0x18] sm:$0xff]
    %v34 = vld [vmem:[#allocation2 + $0x20] sm:$0xff]
    %v35 = vld [vmem:[#allocation2 + $0x28] sm:$0xff]
    %v36 = vld [vmem:[#allocation2 + $0x30] sm:$0xff]
    %v37 = vld [vmem:[#allocation2 + $0x38] sm:$0xf]
    %v38 = vpack.c.bf16 %v31, %v30
    %v39 = vpack.c.bf16 %v33, %v32
    %v40 = vpack.c.bf16 %v35, %v34
    %v41 = vpack.c.bf16 %v37, %v36
    %v42 = vld [vmem:[#allocation2 + $0x40] sm:$0x1]
    %v43 = vperm.slane %v42, 0
    %vm44 = vcmask 490496
    %v46 = vsel %vm44, %v29, 0
    %vm48 = vcmask 1045504
    %v50 = vsel %vm48, %v41, 0
    %52 = vmatpush.bf16.msra.mxu0 0
    %53 = vmatpush.bf16.msra.mxu0 0
    %54 = vmatpush.bf16.msra.mxu0 0
    %55 = vmatpush.bf16.msra.mxu0 0
    %56 = vmatpush.bf16.msra.mxu0 %v50
    %57 = vmatpush.bf16.msra.mxu0 %v40
    %58 = vmatpush.bf16.msra.mxu0 %v39
    %59 = vmatpush.bf16.msra.mxu0 %v38
    %60 = vmatmul.bf16.gmra.mxu0 %v46
    %v61 = vpop.f32.mrf.mxu0
    %v62 = vadd.f32 %v43, %v61
    %v63 = vpop.f32.mrf.mxu0
    %64 = vdwg.mxu0
    %v65 = vmax.f32 %v62, 0.0
    %v66 = vpack.c.bf16 %v65, %v65
    %v67 = vld [vmem:[#allocation2 + $0x48] sm:$0xff]
    %v68 = vld [vmem:[#allocation2 + $0x50] sm:$0xff]
    %v69 = vld [vmem:[#allocation2 + $0x58] sm:$0xff]
    %v70 = vld [vmem:[#allocation2 + $0x60] sm:$0xff]
    %v71 = vpack.c.bf16 %v68, %v67
    %v72 = vpack.c.bf16 %v70, %v69
    %v73 = vld [vmem:[#allocation2 + $0x68] sm:$0x1]
    %v74 = vperm.slane %v73, 0
    %vm75 = vcmask 261120
    %v77 = vsel %vm75, %v66, 0
    %79 = vmatpush.bf16.msra.mxu0 0
    %80 = vmatpush.bf16.msra.mxu0 0
    %81 = vmatpush.bf16.msra.mxu0 0
    %82 = vmatpush.bf16.msra.mxu0 0
    %83 = vmatpush.bf16.msra.mxu0 0
    %84 = vmatpush.bf16.msra.mxu0 0
    %85 = vmatpush.bf16.msra.mxu0 %v72
    %86 = vmatpush.bf16.msra.mxu0 %v71
    %87 = vmatmul.bf16.gmra.mxu0 %v77
    %v88 = vpop.f32.mrf.mxu0
    %v89 = vadd.f32 %v74, %v88
    %v90 = vpop.f32.mrf.mxu0
    %91 = vdwg.mxu0
    %v92 = vmax.f32 %v89, 0.0
    %v93 = vpack.c.bf16 %v92, %v92
    %v94 = vld [vmem:[#allocation2 + $0x70] sm:$0xff]
    %v95 = vld [vmem:[#allocation2 + $0x78] sm:$0xff]
    %v96 = vld [vmem:[#allocation2 + $0x80] sm:$0xff]
    %v97 = vld [vmem:[#allocation2 + $0x88] sm:$0xff]
    %v98 = vpack.c.bf16 %v95, %v94
    %v99 = vpack.c.bf16 %v97, %v96
    %v100 = vld [vmem:[#allocation2 + $0x90] sm:$0x1]
    %v101 = vperm.slane %v100, 0
    %v103 = vsel %vm75, %v93, 0
    %105 = vmatpush.bf16.msra.mxu0 0
    %106 = vmatpush.bf16.msra.mxu0 0
    %107 = vmatpush.bf16.msra.mxu0 0
    %108 = vmatpush.bf16.msra.mxu0 0
    %109 = vmatpush.bf16.msra.mxu0 0
    %110 = vmatpush.bf16.msra.mxu0 0
    %111 = vmatpush.bf16.msra.mxu0 %v99
    %112 = vmatpush.bf16.msra.mxu0 %v98
    %113 = vmatmul.bf16.gmra.mxu0 %v103
    %v114 = vpop.f32.mrf.mxu0
    %v115 = vadd.f32 %v101, %v114
    %v116 = vpop.f32.mrf.mxu0
    %117 = vdwg.mxu0
    %v118 = vmul.f32 %v115, 0.5
    %v119 = vmul.f32 %v118, 1.442695
    %v120 = vpow.pop %v119
    %122 = vrot.lane.b32.xlu0 %v120, 55
    %v123 = vpop.permute.xlu0 %122
    %v125 = vmul.f32 %v28, %v123
    %127 = vrot.lane.b32.xlu0 %v125, 68
    %v128 = vpop.permute.xlu0 %127
    %v130 = vadd.f32 %v115, %v128
    %v131 = vpack.c.bf16 %v130, %v130
    %v132 = vld [vmem:[#allocation2 + $0x98] sm:$0x1f]
    %v133 = vpack.c.bf16 %v132, %v132
    %v134 = vld [vmem:[#allocation2 + $0xa0] sm:$0x1]
    %v135 = vperm.slane %v134, 0
    %vm136 = vcmask 39936
    %v138 = vsel %vm136, %v131, 0
    %vm140 = vcmask 1041408
    %vm141 = vcmask 1042432
    %v142 = vsel %vm140, 4294967295, 65535
    %v143 = vsel %vm141, %v142, 0
    %v145 = vand.u32 %v133, %v143
    %147 = vmatpush.bf16.msra.mxu0 0
    %148 = vmatpush.bf16.msra.mxu0 0
    %149 = vmatpush.bf16.msra.mxu0 0
    %150 = vmatpush.bf16.msra.mxu0 0
    %151 = vmatpush.bf16.msra.mxu0 0
    %152 = vmatpush.bf16.msra.mxu0 0
    %153 = vmatpush.bf16.msra.mxu0 0
    %154 = vmatpush.bf16.msra.mxu0 %v145
    %155 = vmatmul.bf16.gmra.mxu0 %v138
    %v156 = vpop.f32.mrf.mxu0
    %v157 = vadd.f32 %v135, %v156
    %v158 = vpop.f32.mrf.mxu0
    %159 = vdwg.mxu0
    %v160 = vmax.f32 %v157, 0.0
    %v161 = vpack.c.bf16 %v160, %v160
    %v162 = vld [vmem:[#allocation2 + $0xa8] sm:$0xff]
    %v163 = vld [vmem:[#allocation2 + $0xb0] sm:$0xff]
    %v164 = vld [vmem:[#allocation2 + $0xb8] sm:$0xff]
    %v165 = vld [vmem:[#allocation2 + $0xc0] sm:$0xff]
    %v166 = vpack.c.bf16 %v163, %v162
    %v167 = vpack.c.bf16 %v165, %v164
    %v168 = vld [vmem:[#allocation2 + $0xc8] sm:$0x1]
    %v169 = vperm.slane %v168, 0
    %v171 = vsel %vm75, %v161, 0
    %173 = vmatpush.bf16.msra.mxu0 0
    %174 = vmatpush.bf16.msra.mxu0 0
    %175 = vmatpush.bf16.msra.mxu0 0
    %176 = vmatpush.bf16.msra.mxu0 0
    %177 = vmatpush.bf16.msra.mxu0 0
    %178 = vmatpush.bf16.msra.mxu0 0
    %179 = vmatpush.bf16.msra.mxu0 %v167
    %180 = vmatpush.bf16.msra.mxu0 %v166
    %181 = vmatmul.bf16.gmra.mxu0 %v171
    %v182 = vpop.f32.mrf.mxu0
    %v183 = vadd.f32 %v169, %v182
    %v184 = vpop.f32.mrf.mxu0
    %185 = vdwg.mxu0
    %v186 = vmax.f32 %v183, 0.0
    %v187 = vpack.c.bf16 %v186, %v186
    %v188 = vld [vmem:[#allocation2 + $0xd0] sm:$0xff]
    %v189 = vld [vmem:[#allocation2 + $0xd8] sm:$0xff]
    %v190 = vld [vmem:[#allocation2 + $0xe0] sm:$0xff]
    %v191 = vld [vmem:[#allocation2 + $0xe8] sm:$0xff]
    %v192 = vpack.c.bf16 %v189, %v188
    %v193 = vpack.c.bf16 %v191, %v190
    %v194 = vld [vmem:[#allocation2 + $0xf0] sm:$0x1]
    %v195 = vperm.slane %v194, 0
    %v197 = vsel %vm75, %v187, 0
    %199 = vmatpush.bf16.msra.mxu0 0
    %200 = vmatpush.bf16.msra.mxu0 0
    %201 = vmatpush.bf16.msra.mxu0 0
    %202 = vmatpush.bf16.msra.mxu0 0
    %203 = vmatpush.bf16.msra.mxu0 0
    %204 = vmatpush.bf16.msra.mxu0 0
    %205 = vmatpush.bf16.msra.mxu0 %v193
    %206 = vmatpush.bf16.msra.mxu0 %v192
    %207 = vmatmul.bf16.gmra.mxu0 %v197
    %v208 = vpop.f32.mrf.mxu0
    %v209 = vadd.f32 %v195, %v208
    %v210 = vpop.f32.mrf.mxu0
    %211 = vdwg.mxu0
    %212 = vst.msk [vmem:[%s2] sm:$0xff] %vm44, %v209
    %214 = vrot.lane.b32.xlu0 %v115, 60
    %v215 = vpop.permute.xlu0 %214
    %vm217 = vcmask 572896
    %218 = vst.msk [vmem:[%s2] sm:$0xff] %vm217, %v215
    // Predicated region
    $region14: #{vae_forward.1} parent=1 // pred_check
      _
    $region15: #{vae_forward.1} parent=1 // pred_check_branch
      %220 = sbr.rel (0) target = $region17
    $region16: #{vae_forward.1} parent=1 // pred_region
      _
    $region17: #{vae_forward.1} parent=1 // pred_fallthru
      _
    // Predicated region
    $region18: #{vae_forward.1} parent=1 // pred_check
      _
    $region19: #{vae_forward.1} parent=1 // pred_check_branch
      %222 = sbr.rel (0) target = $region21
    $region20: #{vae_forward.1} parent=1 // pred_region
      _
    $region21: #{vae_forward.1} parent=1 // pred_fallthru
      _
    %223 = vsyncpa [#allocation3], 1

</llo_original>
